<compile_context>
chip_gen: v5e
topology: v5e:2x2
jax: 0.10.0
libtpu: 0.0.40
codegen_flags: <defaults>
</compile_context>

<pallas_src>
import functools

import jax
import jax.numpy as jnp
from jax.experimental import pallas as pl
from jax.experimental.pallas import tpu as pltpu


# ----------------------------------------------------------------------------
# Pallas kernel:  one_hot(step) @ (table@W1+b1)  -> SiLU -> @W2 + b2 -> SiLU
# ----------------------------------------------------------------------------
def _diffusion_embedding_kernel(step_ref, tw1b_ref, w2_ref, b2_ref, o_ref):
    # step_ref : VMEM [B, 1]   int32   (clamped to [0, T-1] by the wrapper)
    # tw1b_ref : VMEM [Tp, P]  bf16    (table @ W1 + b1, rows padded to Tp)
    # w2_ref   : VMEM [P, P]   bf16
    # b2_ref   : VMEM [1, P]   f32
    # o_ref    : VMEM [B, P]   f32
    B = o_ref.shape[0]
    Tp = tw1b_ref.shape[0]

    # One-hot gather on the MXU (constant instruction count in B; 0/1 values
    # are exact in bf16, so the gathered rows are just the bf16 TW1b rows).
    steps = step_ref[...]                                           # [B, 1]
    iota = jax.lax.broadcasted_iota(jnp.int32, (B, Tp), 1)          # [B, Tp]
    one_hot = (iota == steps).astype(jnp.bfloat16)                  # [B, Tp]

    # Fused gather + projection1 + bias  (b1 already folded into TW1b).
    h = jnp.dot(one_hot, tw1b_ref[...],
                preferred_element_type=jnp.float32)                 # [B, P] f32
    h = h * jax.nn.sigmoid(h)                                       # SiLU (f32)

    # projection2 + bias + SiLU   (bf16 x bf16 -> f32 accumulate on the MXU)
    y = jnp.dot(h.astype(jnp.bfloat16), w2_ref[...],
                preferred_element_type=jnp.float32)                 # [B, P] f32
    y = y + b2_ref[...]
    y = y * jax.nn.sigmoid(y)                                       # SiLU (f32)

    o_ref[...] = y.astype(o_ref.dtype)


@functools.partial(jax.jit, static_argnames=("num_steps",))
def diffusion_embedding_forward(tw1b, diffusion_step, w2, b2, *, num_steps):
    """DiffusionEmbedding.forward.

    tw1b          : [Tp, P] bf16  precomputed  (embedding_table @ W1 + b1)
    diffusion_step: [B]     int32
    w2            : [P, P]  bf16
    b2            : [1, P]  f32
    returns       : [B, P]  f32
    """
    B = diffusion_step.shape[0]
    P = tw1b.shape[1]

    # Clamp (free, outside the kernel) so out-of-range indices can never
    # produce a silently-zero embedding row from the one-hot gather.
    steps = jnp.clip(diffusion_step.astype(jnp.int32), 0, num_steps - 1)

    # Pad B to a multiple of 8 (f32 output sublanes) so the output store is a
    # full, unmasked vreg tile; pad rows are sliced off after the call.
    Bp = ((B + 7) // 8) * 8
    steps = jnp.pad(steps, (0, Bp - B))[:, None]                    # [Bp, 1]

    out = pl.pallas_call(
        _diffusion_embedding_kernel,
        out_shape=jax.ShapeDtypeStruct((Bp, P), jnp.float32),
        in_specs=[
            pl.BlockSpec(memory_space=pltpu.MemorySpace.VMEM),      # steps
            pl.BlockSpec(memory_space=pltpu.MemorySpace.VMEM),      # tw1b
            pl.BlockSpec(memory_space=pltpu.MemorySpace.VMEM),      # w2
            pl.BlockSpec(memory_space=pltpu.MemorySpace.VMEM),      # b2
        ],
        out_specs=pl.BlockSpec(memory_space=pltpu.MemorySpace.VMEM),
    )(steps, tw1b, w2, b2)

    return out[:B]


# ----------------------------------------------------------------------------
# Parameter / buffer construction (deterministic, in-script)
# ----------------------------------------------------------------------------
def build_embedding_table(num_steps, half_dim):
    """Matches DiffusionEmbedding._build_embedding."""
    steps = jnp.arange(num_steps, dtype=jnp.float32)[:, None]            # [T, 1]
    freqs = 10.0 ** (
        jnp.arange(half_dim, dtype=jnp.float32) / (half_dim - 1) * 4.0
    )[None, :]                                                           # [1, D/2]
    table = steps * freqs                                                # [T, D/2]
    return jnp.concatenate([jnp.sin(table), jnp.cos(table)], axis=1)     # [T, D]


def init_params(key, embedding_dim, projection_dim):
    k1, k2, k3, k4 = jax.random.split(key, 4)
    w1 = jax.random.normal(k1, (embedding_dim, projection_dim), jnp.float32) * 0.05
    b1 = jax.random.normal(k2, (1, projection_dim), jnp.float32) * 0.05
    w2 = jax.random.normal(k3, (projection_dim, projection_dim), jnp.float32) * 0.05
    b2 = jax.random.normal(k4, (1, projection_dim), jnp.float32) * 0.05
    return w1, b1, w2, b2


def precompute_tw1b(embedding_table, w1, b1):
    """Host-side, once: fold the sinusoidal table + first Linear into one
    gatherable [T, P] table, pad rows to a multiple of 8, cast to bf16."""
    tw1b = embedding_table @ w1 + b1                                     # [T, P] f32
    T = tw1b.shape[0]
    Tp = ((T + 7) // 8) * 8
    tw1b = jnp.pad(tw1b, ((0, Tp - T), (0, 0)))
    return tw1b.astype(jnp.bfloat16)


# Pure-JAX f32 reference (PyTorch semantics) for the correctness check.
def reference_forward(embedding_table, diffusion_step, w1, b1, w2, b2):
    x = jnp.take(embedding_table, diffusion_step, axis=0)
    h = x @ w1 + b1
    h = h * jax.nn.sigmoid(h)
    y = h @ w2 + b2
    y = y * jax.nn.sigmoid(y)
    return y


if __name__ == "__main__":
    num_steps = 50          # diffusion steps in the table
    embedding_dim = 128     # module default
    projection_dim = 128    # defaults to embedding_dim
    batch = 8               # number of diffusion-step indices queried at once

    key = jax.random.PRNGKey(0)
    k_step, k_params = jax.random.split(key)

    embedding_table = build_embedding_table(num_steps, embedding_dim // 2)
    w1, b1, w2, b2 = init_params(k_params, embedding_dim, projection_dim)

    # Host-side precompute / casts (once per model load).
    tw1b_bf = precompute_tw1b(embedding_table, w1, b1)   # [Tp, P] bf16
    w2_bf = w2.astype(jnp.bfloat16)

    diffusion_step = jax.random.randint(k_step, (batch,), 0, num_steps, jnp.int32)

    out = diffusion_embedding_forward(
        tw1b_bf, diffusion_step, w2_bf, b2, num_steps=num_steps
    )
    out = jax.block_until_ready(out)

    ref = reference_forward(embedding_table, diffusion_step, w1, b1, w2, b2)
    assert out.shape == (batch, projection_dim)
    # Tolerance accounts for bf16-rounded (table@W1+b1) rows and bf16 W2 /
    # activations feeding the MXU vs. the full-f32 reference.
    max_err = float(jnp.max(jnp.abs(out - ref)))
    assert jnp.allclose(out, ref, atol=2e-2, rtol=2e-2), (
        f"mismatch vs reference (max abs err {max_err})"
    )

    print("KERNEL_OK")
</pallas_src>

<mosaic_0001>
module attributes {stable_mosaic.version = 11 : i64} {
  func.func @_diffusion_embedding_kernel(%arg0: memref<8x1xi32, #tpu.memory_space<vmem>>, %arg1: memref<56x128xbf16, #tpu.memory_space<vmem>>, %arg2: memref<128x128xbf16, #tpu.memory_space<vmem>>, %arg3: memref<1x128xf32, #tpu.memory_space<vmem>>, %arg4: memref<8x128xf32, #tpu.memory_space<vmem>>) attributes {dimension_semantics = [], scalar_prefetch = 0 : i64, scratch_operands = 0 : i64, tpu.core_type = #tpu.core_type<tc>} {
    %c0 = arith.constant 0 : index
    %c0_0 = arith.constant 0 : index
    %0 = vector.load %arg0[%c0, %c0_0] : memref<8x1xi32, #tpu.memory_space<vmem>>, vector<8x1xi32>
    %1 = tpu.iota {dimensions = array<i32: 1>} : vector<8x56xi32>
    %2 = vector.broadcast %0 : vector<8x1xi32> to vector<8x56xi32>
    %3 = arith.cmpi eq, %1, %2 : vector<8x56xi32>
    %4 = arith.extui %3 : vector<8x56xi1> to vector<8x56xi32>
    %5 = arith.sitofp %4 : vector<8x56xi32> to vector<8x56xf32>
    %6 = arith.truncf %5 : vector<8x56xf32> to vector<8x56xbf16>
    %c0_1 = arith.constant 0 : index
    %c0_2 = arith.constant 0 : index
    %7 = vector.load %arg1[%c0_1, %c0_2] : memref<56x128xbf16, #tpu.memory_space<vmem>>, vector<56x128xbf16>
    %cst = arith.constant dense<0.000000e+00> : vector<8x128xf32>
    %8 = tpu.matmul %6, %7, %cst {dimension_numbers = #tpu.dot_dimension_numbers<[1], [0], [0], [1], [0, 0, 1, 1], [], []>} : vector<8x56xbf16>, vector<56x128xbf16>, vector<8x128xf32> -> vector<8x128xf32>
    %9 = arith.negf %8 : vector<8x128xf32>
    %10 = math.exp %9 : vector<8x128xf32>
    %cst_3 = arith.constant 1.000000e+00 : f32
    %11 = vector.broadcast %cst_3 : f32 to vector<8x128xf32>
    %12 = arith.addf %11, %10 : vector<8x128xf32>
    %13 = arith.divf %11, %12 : vector<8x128xf32>
    %14 = arith.mulf %8, %13 : vector<8x128xf32>
    %15 = arith.truncf %14 : vector<8x128xf32> to vector<8x128xbf16>
    %c0_4 = arith.constant 0 : index
    %c0_5 = arith.constant 0 : index
    %16 = vector.load %arg2[%c0_4, %c0_5] : memref<128x128xbf16, #tpu.memory_space<vmem>>, vector<128x128xbf16>
    %cst_6 = arith.constant dense<0.000000e+00> : vector<8x128xf32>
    %17 = tpu.matmul %15, %16, %cst_6 {dimension_numbers = #tpu.dot_dimension_numbers<[1], [0], [0], [1], [0, 0, 1, 1], [], []>} : vector<8x128xbf16>, vector<128x128xbf16>, vector<8x128xf32> -> vector<8x128xf32>
    %c0_7 = arith.constant 0 : index
    %c0_8 = arith.constant 0 : index
    %18 = vector.load %arg3[%c0_7, %c0_8] : memref<1x128xf32, #tpu.memory_space<vmem>>, vector<1x128xf32>
    %19 = vector.broadcast %18 : vector<1x128xf32> to vector<8x128xf32>
    %20 = arith.addf %17, %19 : vector<8x128xf32>
    %21 = arith.negf %20 : vector<8x128xf32>
    %22 = math.exp %21 : vector<8x128xf32>
    %cst_9 = arith.constant 1.000000e+00 : f32
    %23 = vector.broadcast %cst_9 : f32 to vector<8x128xf32>
    %24 = arith.addf %23, %22 : vector<8x128xf32>
    %25 = arith.divf %23, %24 : vector<8x128xf32>
    %26 = arith.mulf %20, %25 : vector<8x128xf32>
    %c0_10 = arith.constant 0 : index
    %c0_11 = arith.constant 0 : index
    %27 = vector.load %arg4[%c0_10, %c0_11] : memref<8x128xf32, #tpu.memory_space<vmem>>, vector<8x128xf32>
    tpu.vector_store %arg4[%c0_10, %c0_11], %26 {strides = array<i32>} : memref<8x128xf32, #tpu.memory_space<vmem>>, vector<8x128xf32>,
    return
  }
}

</mosaic_0001>

<llo_original>
// kernel: diffusion_embedding_forward.1
$region0: #{diffusion_embedding_forward.1}
  #allocation0 [shape = 'u32[]', space=smem, size = 0x4, offset = 0x4, fixed_abs, tag = 'smem constant byte address 0x4 - core index']
  #allocation1 [shape = 'u32[72,128]{1,0:T(1,128)}', space=vmem, size = 0x9000, scoped, tag = 'internal scratch']
  %s0 = inlined_call_operand.vmem [shape: s32[8,1], index: 0, kind: input, shape index: {}]
  %s1 = inlined_call_operand.hbm [shape: bf16[56,128], index: 1, kind: input, shape index: {}]
  %s2 = inlined_call_operand.hbm [shape: bf16[128,128], index: 2, kind: input, shape index: {}]
  %s3 = inlined_call_operand.vmem [shape: f32[1,128], index: 3, kind: input, shape index: {}]
  %s4 = inlined_call_operand.hbm [shape: f32[8,128], index: 4, kind: output, shape index: {}]
  %s5 = sld [smem:[#allocation0]]
  $region34: #{diffusion_embedding_forward.1} parent=0
    _
  %s7 = ssub.s32 1, %s5
  %s8 = scalar_select 0, %s7, %s5
  $region1: #{diffusion_embedding_forward.1} parent=0
    #allocation2 [shape = 'u8[14336]{0}', space=vmem, size = 0x3800, scoped, tag = 'input window, operand 1, single buffered']
    #allocation3 [shape = 's32[1]{0}', space=sflag, size = 0x4, scoped, tag = 'scoped memory for diffusion_embedding_forward.1']
    #allocation4 [shape = 's32[1]{0}', space=sflag, size = 0x4, scoped, tag = 'scoped memory for diffusion_embedding_forward.1']
    #allocation5 [shape = 'u8[32768]{0}', space=vmem, size = 0x8000, scoped, tag = 'input window, operand 2, single buffered']
    #allocation6 [shape = 's32[1]{0}', space=sflag, size = 0x4, scoped, tag = 'scoped memory for diffusion_embedding_forward.1']
    #allocation7 [shape = 'u8[4096]{0}', space=vmem, size = 0x1000, scoped, tag = 'output window, operand 0, single buffered']
    %9 = vsyncpa [#allocation3], 0
    %10 = vsyncpa [#allocation6], 0
    %11 = vsyncpa [#allocation4], 0
    // Predicated region
    $region2: #{diffusion_embedding_forward.1} parent=1 // pred_check
      _
    $region3: #{diffusion_embedding_forward.1} parent=1 // pred_check_branch
      %13 = sbr.rel (0) target = $region5
    $region4: #{diffusion_embedding_forward.1} parent=1 // pred_region
      _
    $region5: #{diffusion_embedding_forward.1} parent=1 // pred_fallthru
      _
    // Predicated region
    $region6: #{diffusion_embedding_forward.1} parent=1 // pred_check
      _
    $region7: #{diffusion_embedding_forward.1} parent=1 // pred_check_branch
      %15 = sbr.rel (0) target = $region9
    $region8: #{diffusion_embedding_forward.1} parent=1 // pred_region
      %17 = vsyncadd [#allocation3], 0
      %s18 = sshll.u32 %s1, 4
      %s19 = int_to_ptr.hbm [resolvable:$true] %s18
      %s20 = sshll.u32 [#allocation2], 4
      %s21 = int_to_ptr.vmem [resolvable:$true] %s20
      %26 = dma.hbm_to_vmem [thread:$0]  %s19, 448, %s21, [#allocation3], 64, 64, 4
    $region9: #{diffusion_embedding_forward.1} parent=1 // pred_fallthru
      _
    // Predicated region
    $region10: #{diffusion_embedding_forward.1} parent=1 // pred_check
      _
    $region11: #{diffusion_embedding_forward.1} parent=1 // pred_check_branch
      %28 = sbr.rel (0) target = $region13
    $region12: #{diffusion_embedding_forward.1} parent=1 // pred_region
      %30 = vsyncadd [#allocation6], 0
      %s31 = sshll.u32 %s2, 4
      %s32 = int_to_ptr.hbm [resolvable:$true] %s31
      %s33 = sshll.u32 [#allocation5], 4
      %s34 = int_to_ptr.vmem [resolvable:$true] %s33
      %39 = dma.hbm_to_vmem [thread:$0]  %s32, 1024, %s34, [#allocation6], 64, 64, 4
    $region13: #{diffusion_embedding_forward.1} parent=1 // pred_fallthru
      _
    // Predicated region
    $region14: #{diffusion_embedding_forward.1} parent=1 // pred_check
      _
    $region15: #{diffusion_embedding_forward.1} parent=1 // pred_check_branch
      %41 = sbr.rel (0) target = $region17
    $region16: #{diffusion_embedding_forward.1} parent=1 // pred_region
      _
    $region17: #{diffusion_embedding_forward.1} parent=1 // pred_fallthru
      _
    // Predicated region
    $region18: #{diffusion_embedding_forward.1} parent=1 // pred_check
      _
    $region19: #{diffusion_embedding_forward.1} parent=1 // pred_check_branch
      %43 = sbr.rel (0) target = $region21
    $region20: #{diffusion_embedding_forward.1} parent=1 // pred_region
      %45 = dma.done [#allocation3], 448
    $region21: #{diffusion_embedding_forward.1} parent=1 // pred_fallthru
      _
    // Predicated region
    $region22: #{diffusion_embedding_forward.1} parent=1 // pred_check
      _
    $region23: #{diffusion_embedding_forward.1} parent=1 // pred_check_branch
      %47 = sbr.rel (0) target = $region25
    $region24: #{diffusion_embedding_forward.1} parent=1 // pred_region
      %49 = dma.done [#allocation6], 1024
    $region25: #{diffusion_embedding_forward.1} parent=1 // pred_fallthru
      _
    %v51 = vld [vmem:[%s0] sm:$0xff]
    %v52 = vlaneseq
    %v53 = vand.u32 %v52, 127
    %54 = vset.pattern.permute.xlu0 0
    %55 = vperm.xlu0 %54, %v51
    %v56 = vpop.permute.xlu0 %55
    %vm57 = vcmp.eq.s32.totalorder %v53, %v56
    %v58 = vsel %vm57, 1, 0
    %v59 = vcvt.s32.f32 %v58
    %v60 = vpack.c.bf16 %v59, %v59
    %v61 = vld [vmem:[#allocation2] sm:$0xf]
    %v62 = vld [vmem:[#allocation2 + $0x4] sm:$0xf]
    %v63 = vld [vmem:[#allocation2 + $0x8] sm:$0xf]
    %v64 = vld [vmem:[#allocation2 + $0xc] sm:$0xf]
    %v65 = vld [vmem:[#allocation2 + $0x10] sm:$0xf]
    %v66 = vld [vmem:[#allocation2 + $0x14] sm:$0xf]
    %v67 = vld [vmem:[#allocation2 + $0x18] sm:$0xf]
    %v75 = vunpack.c.l.b16 %v61
    %v76 = vunpack.c.l.b16 %v62
    %v77 = vunpack.c.l.b16 %v63
    %v78 = vunpack.c.l.b16 %v64
    %v79 = vunpack.c.l.b16 %v65
    %v80 = vunpack.c.l.b16 %v66
    %v81 = vunpack.c.l.b16 %v67
    %v82 = vpack.c.b16 %v76, %v75
    %v83 = vpack.c.b16 %v78, %v77
    %v84 = vpack.c.b16 %v80, %v79
    %v85 = vpack.c.b16 %v81, %v81
    %vm89 = vcmask 457728
    %v91 = vsel %vm89, %v60, 0
    %vm93 = vcmask 1043456
    %v95 = vsel %vm93, %v85, 0
    %97 = vmatpush.bf16.msra.mxu0 0
    %98 = vmatpush.bf16.msra.mxu0 0
    %99 = vmatpush.bf16.msra.mxu0 0
    %100 = vmatpush.bf16.msra.mxu0 0
    %101 = vmatpush.bf16.msra.mxu0 %v95
    %102 = vmatpush.bf16.msra.mxu0 %v84
    %103 = vmatpush.bf16.msra.mxu0 %v83
    %104 = vmatpush.bf16.msra.mxu0 %v82
    %105 = vmatmul.bf16.gmra.mxu0 %v91
    %v106 = vpop.f32.mrf.mxu0
    %v107 = vadd.f32 0.0, %v106
    %v108 = vpop.f32.mrf.mxu0
    %109 = vdwg.mxu0
    %v110 = vxor.u32 %v107, 2147483648
    %v111 = vmul.f32 %v110, 1.442695
    %v112 = vpow.pop %v111
    %v113 = vadd.f32 %v112, 1.0
    %v114 = vrcp.pop %v113
    %v115 = vmul.f32 %v113, %v114
    %v116 = vsub.f32 1.0, %v115
    %v117 = vmul.f32 %v114, %v116
    %v118 = vadd.f32 %v114, %v117
    %vm119 = vweird.f32 %v113
    %vm120 = vweird.f32 %v114
    %vm121 = vmor %vm119, %vm120
    %v122 = vsel %vm121, %v114, %v118
    %v123 = vand.u32 2147483647, %v113
    %vm124 = vcmp.eq.f32.partialorder %v123, 8.507059e+37
    %v125 = vand.u32 %v113, 2147483648
    %v126 = vor.u32 1.1754944e-38, %v125
    %v127 = vsel %vm124, %v126, %v122
    %v128 = vmul.f32 1.0, %v127
    %v129 = vmul.f32 %v107, %v128
    %v130 = vpack.c.bf16 %v129, %v129
    %v131 = vld [vmem:[#allocation5] sm:$0xf]
    %v132 = vld [vmem:[#allocation5 + $0x4] sm:$0xf]
    %v133 = vld [vmem:[#allocation5 + $0x8] sm:$0xf]
    %v134 = vld [vmem:[#allocation5 + $0xc] sm:$0xf]
    %v135 = vld [vmem:[#allocation5 + $0x10] sm:$0xf]
    %v136 = vld [vmem:[#allocation5 + $0x14] sm:$0xf]
    %v137 = vld [vmem:[#allocation5 + $0x18] sm:$0xf]
    %v138 = vld [vmem:[#allocation5 + $0x1c] sm:$0xf]
    %v139 = vld [vmem:[#allocation5 + $0x20] sm:$0xf]
    %v140 = vld [vmem:[#allocation5 + $0x24] sm:$0xf]
    %v141 = vld [vmem:[#allocation5 + $0x28] sm:$0xf]
    %v142 = vld [vmem:[#allocation5 + $0x2c] sm:$0xf]
    %v143 = vld [vmem:[#allocation5 + $0x30] sm:$0xf]
    %v144 = vld [vmem:[#allocation5 + $0x34] sm:$0xf]
    %v145 = vld [vmem:[#allocation5 + $0x38] sm:$0xf]
    %v146 = vld [vmem:[#allocation5 + $0x3c] sm:$0xf]
    %v147 = vld [vmem:[%s3] sm:$0x1]
    %v149 = vperm.slane %v147, 0
    %v167 = vunpack.c.l.b16 %v131
    %v168 = vunpack.c.l.b16 %v132
    %v169 = vunpack.c.l.b16 %v133
    %v170 = vunpack.c.l.b16 %v134
    %v171 = vunpack.c.l.b16 %v135
    %v172 = vunpack.c.l.b16 %v136
    %v173 = vunpack.c.l.b16 %v137
    %v174 = vunpack.c.l.b16 %v138
    %v175 = vunpack.c.l.b16 %v139
    %v176 = vunpack.c.l.b16 %v140
    %v177 = vunpack.c.l.b16 %v141
    %v178 = vunpack.c.l.b16 %v142
    %v179 = vunpack.c.l.b16 %v143
    %v180 = vunpack.c.l.b16 %v144
    %v181 = vunpack.c.l.b16 %v145
    %v182 = vunpack.c.l.b16 %v146
    %v183 = vpack.c.b16 %v168, %v167
    %v184 = vpack.c.b16 %v170, %v169
    %v185 = vpack.c.b16 %v172, %v171
    %v186 = vpack.c.b16 %v174, %v173
    %v187 = vpack.c.b16 %v176, %v175
    %v188 = vpack.c.b16 %v178, %v177
    %v189 = vpack.c.b16 %v180, %v179
    %v190 = vpack.c.b16 %v182, %v181
    %199 = vmatpush.bf16.msra.mxu0 %v190
    %200 = vmatpush.bf16.msra.mxu0 %v189
    %201 = vmatpush.bf16.msra.mxu0 %v188
    %202 = vmatpush.bf16.msra.mxu0 %v187
    %203 = vmatpush.bf16.msra.mxu0 %v186
    %204 = vmatpush.bf16.msra.mxu0 %v185
    %205 = vmatpush.bf16.msra.mxu0 %v184
    %206 = vmatpush.bf16.msra.mxu0 %v183
    %207 = vmatmul.bf16.gmra.mxu0 %v130
    %v208 = vpop.f32.mrf.mxu0
    %v209 = vadd.f32 %v149, %v208
    %v210 = vpop.f32.mrf.mxu0
    %211 = vdwg.mxu0
    %v212 = vxor.u32 %v209, 2147483648
    %v213 = vmul.f32 %v212, 1.442695
    %v214 = vpow.pop %v213
    %v215 = vadd.f32 %v214, 1.0
    %v216 = vrcp.pop %v215
    %v217 = vmul.f32 %v215, %v216
    %v218 = vsub.f32 1.0, %v217
    %v219 = vmul.f32 %v216, %v218
    %v220 = vadd.f32 %v216, %v219
    %vm221 = vweird.f32 %v215
    %vm222 = vweird.f32 %v216
    %vm223 = vmor %vm221, %vm222
    %v224 = vsel %vm223, %v216, %v220
    %v225 = vand.u32 2147483647, %v215
    %vm226 = vcmp.eq.f32.partialorder %v225, 8.507059e+37
    %v227 = vand.u32 %v215, 2147483648
    %v228 = vor.u32 1.1754944e-38, %v227
    %v229 = vsel %vm226, %v228, %v224
    %v230 = vmul.f32 1.0, %v229
    %v231 = vmul.f32 %v209, %v230
    %232 = vst [vmem:[#allocation7] sm:$0xff] %v231
    // Predicated region
    $region26: #{diffusion_embedding_forward.1} parent=1 // pred_check
      _
    $region27: #{diffusion_embedding_forward.1} parent=1 // pred_check_branch
      %234 = sbr.rel (0) target = $region29
    $region28: #{diffusion_embedding_forward.1} parent=1 // pred_region
      %236 = vsyncadd [#allocation4], 0
      %s238 = sshll.u32 [#allocation7], 4
      %s239 = int_to_ptr.vmem [resolvable:$true] %s238
      %s240 = sshll.u32 %s4, 4
      %s241 = int_to_ptr.hbm [resolvable:$true] %s240
      %243 = dma.vmem_to_hbm [thread:$0]  %s239, 128, %s241, [#allocation4]
    $region29: #{diffusion_embedding_forward.1} parent=1 // pred_fallthru
      _
    // Predicated region
    $region30: #{diffusion_embedding_forward.1} parent=1 // pred_check
      _
    $region31: #{diffusion_embedding_forward.1} parent=1 // pred_check_branch
      %245 = sbr.rel (0) target = $region33
    $region32: #{diffusion_embedding_forward.1} parent=1 // pred_region
      %247 = dma.done [#allocation4], 128
    $region33: #{diffusion_embedding_forward.1} parent=1 // pred_fallthru
      _
    %248 = vsyncpa [#allocation3], 1
    %249 = vsyncpa [#allocation6], 1
    %250 = vsyncpa [#allocation4], 1

</llo_original>
